<compile_context>
chip_gen: v7x
topology: tpu7x:2x2x1
jax: 0.10.0
libtpu: 0.0.40
codegen_flags: <defaults>
</compile_context>

<pallas_src>
import math

import jax
import jax.numpy as jnp
from jax.experimental import pallas as pl
from jax.experimental.pallas import tpu as pltpu


# ----------------------------- Pallas kernels --------------------------------

def _ffn_kernel_f32out(x_ref, w1_ref, b1_ref, w2_ref, b2_ref, o_ref):
    """Fused FFN step, fp32 output: accumulate directly into the resident
    output block (no scratch).  grid = (row tiles, d_ff chunks)."""
    f = pl.program_id(1)

    @pl.when(f == 0)
    def _init():
        # Seed the accumulator with the second bias (saves a finalize pass).
        o_ref[...] = jnp.broadcast_to(b2_ref[...], o_ref.shape)

    # First linear (this hidden chunk) + bias + ReLU in fp32.
    h = jnp.dot(x_ref[...], w1_ref[...], preferred_element_type=jnp.float32)
    h = jnp.maximum(h + b1_ref[...], 0.0)
    # TODO(synk): dropout(0.1) skipped — eval-mode no-op.

    # Second linear: this chunk's contribution to the output tile.
    o_ref[...] += jnp.dot(h.astype(w2_ref.dtype), w2_ref[...],
                          preferred_element_type=jnp.float32)


def _ffn_kernel_scratch(x_ref, w1_ref, b1_ref, w2_ref, b2_ref, o_ref, acc_ref):
    """Fused FFN step for non-fp32 output dtypes: fp32 VMEM accumulator,
    cast + store on the last d_ff chunk."""
    f = pl.program_id(1)

    @pl.when(f == 0)
    def _init():
        acc_ref[...] = jnp.broadcast_to(b2_ref[...], acc_ref.shape)

    h = jnp.dot(x_ref[...], w1_ref[...], preferred_element_type=jnp.float32)
    h = jnp.maximum(h + b1_ref[...], 0.0)
    acc_ref[...] += jnp.dot(h.astype(w2_ref.dtype), w2_ref[...],
                            preferred_element_type=jnp.float32)

    @pl.when(f == pl.num_programs(1) - 1)
    def _finalize():
        o_ref[...] = acc_ref[...].astype(o_ref.dtype)


# ------------------------------ helpers --------------------------------------

def _round_up(x, m):
    return ((x + m - 1) // m) * m


def _tpu_generation():
    try:
        kind = jax.devices()[0].device_kind.lower()
    except Exception:
        return None
    for gen, tags in (("v7", ("v7", "tpu7")),
                      ("v6", ("v6", "tpu6")),
                      ("v5", ("v5", "tpu5"))):
        if any(t in kind for t in tags):
            return gen
    return None


# Generation-aware preferences (see header comment for the roofline math).
_GEN_DEFAULTS = {
    "v5": dict(tm=256, tf=512, vmem=64 << 20),
    "v6": dict(tm=768, tf=1024, vmem=96 << 20),
    "v7": dict(tm=512, tf=512, vmem=52 << 20),
}
_FALLBACK_DEFAULTS = dict(tm=256, tf=512, vmem=None)


def _choose_divisor_tile(dim, preferred, granule):
    """Largest tile <= preferred that is a multiple of `granule` and divides
    `dim` evenly; falls back to the full dim (always a legal block shape)."""
    if dim <= preferred:
        return dim
    t = (preferred // granule) * granule
    while t >= granule:
        if dim % t == 0:
            return t
        t -= granule
    return dim


def _vmem_estimate(tm, tf, d_model, out_itemsize, use_scratch):
    """Rough double-buffered working-set estimate (bytes)."""
    bf = 2  # bf16 operands
    est = (2 * tm * d_model * bf          # x tile
           + 2 * d_model * tf * bf        # W1^T chunk
           + 2 * tf * d_model * bf        # W2^T chunk
           + 2 * (tf + d_model) * 4       # biases (fp32)
           + 2 * tm * d_model * out_itemsize  # output tile
           + tm * tf * 4)                 # h intermediate (fp32)
    if use_scratch:
        est += tm * d_model * 4           # fp32 accumulator scratch
    return est


def _fit_vmem(tm, tf, d_ff, d_model, out_itemsize, use_scratch, budget):
    """Shrink tf (preferred) then tm until the working set fits the budget."""
    while _vmem_estimate(tm, tf, d_model, out_itemsize, use_scratch) > budget:
        if tf % 256 == 0 and tf >= 256 and d_ff % (tf // 2) == 0:
            tf //= 2
        elif tm > 16:
            tm = max(16, _round_up(tm // 2, 16))
        else:
            break
    return tm, tf


def prepare_params(torch_layout_params, compute_dtype=jnp.bfloat16):
    """Pre-transpose PyTorch (out_features, in_features) Linear weights ONCE
    to (in, out) layout and cast matmul operands to the MXU compute dtype.
    Biases stay fp32 (added into the fp32 accumulator)."""
    w1 = jnp.asarray(torch_layout_params["w1"])
    b1 = jnp.asarray(torch_layout_params["b1"], jnp.float32)
    w2 = jnp.asarray(torch_layout_params["w2"])
    b2 = jnp.asarray(torch_layout_params["b2"], jnp.float32)
    return {
        "w1t": w1.T.astype(compute_dtype),        # (d_model, d_ff)
        "b1": b1.reshape(1, -1),                  # (1, d_ff)
        "w2t": w2.T.astype(compute_dtype),        # (d_ff, d_model)
        "b2": b2.reshape(1, -1),                  # (1, d_model)
    }


# ------------------------------ JAX wrapper -----------------------------------

def feed_forward(x, params, *, tm_pref=None, tf_pref=None,
                 compute_dtype=jnp.bfloat16, out_dtype=None,
                 vmem_limit_bytes=None):
    """Forward pass equivalent to the PyTorch FeedForward module (eval mode).

    x: (..., d_model).  params: output of prepare_params().
    NOTE: activations / intermediate h are cast to `compute_dtype` (bf16) for
    the MXU matmuls; accumulation and bias math are fp32.
    """
    orig_shape = x.shape
    d_model = orig_shape[-1]
    M = math.prod(orig_shape[:-1])

    w1t, b1 = params["w1t"], params["b1"]
    w2t, b2 = params["w2t"], params["b2"]
    d_ff = w1t.shape[1]
    assert w1t.shape == (d_model, d_ff) and w2t.shape == (d_ff, d_model)

    gen = _tpu_generation()
    gd = _GEN_DEFAULTS.get(gen, _FALLBACK_DEFAULTS)
    if tm_pref is None:
        tm_pref = gd["tm"]
    if tf_pref is None:
        tf_pref = gd["tf"]
    if vmem_limit_bytes is None:
        vmem_limit_bytes = gd["vmem"]

    out_dtype = jnp.dtype(x.dtype if out_dtype is None else out_dtype)
    use_scratch = out_dtype != jnp.dtype(jnp.float32)

    # --- tile selection -------------------------------------------------------
    # tf must divide d_ff (lane-granular); tm can be any 16-multiple since we
    # pad M up to a tile multiple in the wrapper.
    tf = _choose_divisor_tile(d_ff, tf_pref, 128)
    tm = min(_round_up(max(tm_pref, 16), 16), _round_up(M, 16))

    # v7x has 2 TensorCores on the "parallel" row axis: make sure it gets >=2
    # row tiles when there is enough work to split.
    if gen == "v7" and M > tm and False:
        pass  # (tm already < M ⇒ multiple tiles)
    if gen == "v7" and _round_up(M, tm) // tm == 1 and M >= 32:
        tm = _round_up((M + 1) // 2, 16)

    # Fit the double-buffered working set into the scoped-VMEM budget.
    budget = int(0.8 * (vmem_limit_bytes if vmem_limit_bytes else (28 << 20)))
    tm, tf = _fit_vmem(tm, tf, d_ff, d_model, out_dtype.itemsize,
                       use_scratch, budget)

    Mpad = _round_up(M, tm)
    grid = (Mpad // tm, d_ff // tf)

    x2 = x.reshape(M, d_model).astype(compute_dtype)
    if Mpad != M:
        x2 = jnp.pad(x2, ((0, Mpad - M), (0, 0)))

    kernel = _ffn_kernel_scratch if use_scratch else _ffn_kernel_f32out
    scratch_shapes = ([pltpu.VMEM((tm, d_model), jnp.float32)]
                      if use_scratch else [])

    out = pl.pallas_call(
        kernel,
        out_shape=jax.ShapeDtypeStruct((Mpad, d_model), out_dtype),
        grid_spec=pltpu.PrefetchScalarGridSpec(
            num_scalar_prefetch=0,
            grid=grid,
            in_specs=[
                pl.BlockSpec((tm, d_model), lambda i, f: (i, 0)),   # x tile
                pl.BlockSpec((d_model, tf), lambda i, f: (0, f)),   # W1^T chunk
                pl.BlockSpec((1, tf),       lambda i, f: (0, f)),   # b1 chunk
                pl.BlockSpec((tf, d_model), lambda i, f: (f, 0)),   # W2^T chunk
                pl.BlockSpec((1, d_model),  lambda i, f: (0, 0)),   # b2
            ],
            out_specs=pl.BlockSpec((tm, d_model), lambda i, f: (i, 0)),
            scratch_shapes=scratch_shapes,
        ),
        compiler_params=pltpu.CompilerParams(
            dimension_semantics=("parallel", "arbitrary"),
            vmem_limit_bytes=vmem_limit_bytes),
    )(x2, w1t, b1, w2t, b2)

    if Mpad != M:
        out = out[:M]
    return out.reshape(orig_shape[:-1] + (d_model,))


# --------------------------- pure-JAX reference ------------------------------

def _reference(x, torch_layout_params):
    w1 = jnp.asarray(torch_layout_params["w1"], jnp.float32)
    b1 = jnp.asarray(torch_layout_params["b1"], jnp.float32)
    w2 = jnp.asarray(torch_layout_params["w2"], jnp.float32)
    b2 = jnp.asarray(torch_layout_params["b2"], jnp.float32)
    h = jnp.maximum(x @ w1.T + b1, 0.0)          # dropout is eval-mode no-op
    return h @ w2.T + b2


# ---------------------------------- main -------------------------------------

if __name__ == "__main__":
    d_model, d_ff = 32, 256
    bs, seq = 2, 8

    key = jax.random.PRNGKey(0)
    k1, k2, k3, k4, kx = jax.random.split(key, 5)
    torch_params = {
        "w1": jax.random.normal(k1, (d_ff, d_model), jnp.float32) / math.sqrt(d_model),
        "b1": jax.random.normal(k2, (d_ff,), jnp.float32) / math.sqrt(d_model),
        "w2": jax.random.normal(k3, (d_model, d_ff), jnp.float32) / math.sqrt(d_ff),
        "b2": jax.random.normal(k4, (d_model,), jnp.float32) / math.sqrt(d_ff),
    }
    x = jax.random.normal(kx, (bs, seq, d_model), jnp.float32)

    params = prepare_params(torch_params)  # one-time transpose + bf16 cast
    ref = _reference(x.astype(jnp.float32), torch_params)

    # 1) Small tiles so the toy shapes exercise BOTH grid axes (row tiling +
    #    hidden-chunk accumulation into the resident output block).
    out = feed_forward(x, params, tm_pref=16, tf_pref=128)
    out = jax.block_until_ready(out)
    assert out.shape == (bs, seq, d_model)
    md = float(jnp.max(jnp.abs(out - ref)))
    assert jnp.allclose(out, ref, atol=2e-2, rtol=2e-2), f"mismatch (tiled): {md}"

    # 2) Generation-aware default tiles (production path; here collapses to a
    #    single block, but exercises the auto tile/VMEM selection).
    out_d = jax.block_until_ready(feed_forward(x, params))
    md = float(jnp.max(jnp.abs(out_d - ref)))
    assert jnp.allclose(out_d, ref, atol=2e-2, rtol=2e-2), f"mismatch (default): {md}"

    # 3) Row-padding path (M not a multiple of tm).
    x_odd = jax.random.normal(kx, (bs, 7, d_model), jnp.float32)
    ref_odd = _reference(x_odd, torch_params)
    out_odd = jax.block_until_ready(
        feed_forward(x_odd, params, tm_pref=16, tf_pref=128))
    assert out_odd.shape == (bs, 7, d_model)
    md = float(jnp.max(jnp.abs(out_odd - ref_odd)))
    assert jnp.allclose(out_odd, ref_odd, atol=2e-2, rtol=2e-2), f"mismatch (pad): {md}"

    # 4) bf16-output path (fp32 scratch accumulator + cast-on-finalize).
    out_bf = jax.block_until_ready(
        feed_forward(x, params, tm_pref=16, tf_pref=128, out_dtype=jnp.bfloat16))
    md = float(jnp.max(jnp.abs(out_bf.astype(jnp.float32) - ref)))
    assert jnp.allclose(out_bf.astype(jnp.float32), ref, atol=5e-2, rtol=5e-2), \
        f"mismatch (bf16 out): {md}"

    print("KERNEL_OK")
</pallas_src>

<mosaic_0001>
module attributes {stable_mosaic.version = 11 : i64} {
  func.func @_ffn_kernel_f32out(%arg0: i32, %arg1: i32, %arg2: memref<16x32xbf16, #tpu.memory_space<vmem>>, %arg3: memref<32x128xbf16, #tpu.memory_space<vmem>>, %arg4: memref<1x128xf32, #tpu.memory_space<vmem>>, %arg5: memref<128x32xbf16, #tpu.memory_space<vmem>>, %arg6: memref<1x32xf32, #tpu.memory_space<vmem>>, %arg7: memref<16x32xf32, #tpu.memory_space<vmem>>) attributes {dimension_semantics = [#tpu.dimension_semantics<parallel>, #tpu.dimension_semantics<arbitrary>], iteration_bounds = array<i64: 1, 2>, scalar_prefetch = 0 : i64, scratch_operands = 0 : i64, tpu.core_type = #tpu.core_type<tc>, window_params = [{transform_indices = @transform_0, window_bounds = array<i64: 16, 32>}, {transform_indices = @transform_1, window_bounds = array<i64: 32, 128>}, {transform_indices = @transform_2, window_bounds = array<i64: 1, 128>}, {transform_indices = @transform_3, window_bounds = array<i64: 128, 32>}, {pipeline_mode = #tpu.pipeline_mode<synchronous>, transform_indices = @transform_4, window_bounds = array<i64: 1, 32>}, {transform_indices = @transform_5, window_bounds = array<i64: 16, 32>}]} {
    %c0_i32 = arith.constant 0 : i32
    %0 = arith.cmpi eq, %arg1, %c0_i32 : i32
    %1 = arith.extui %0 : i1 to i32
    %c0_i32_0 = arith.constant 0 : i32
    %2 = arith.cmpi ne, %1, %c0_i32_0 : i32
    scf.if %2 {
      %c0_14 = arith.constant 0 : index
      %c0_15 = arith.constant 0 : index
      %17 = vector.load %arg6[%c0_14, %c0_15] : memref<1x32xf32, #tpu.memory_space<vmem>>, vector<1x32xf32>
      %18 = vector.shape_cast %17 : vector<1x32xf32> to vector<1x32xf32>
      %19 = vector.broadcast %18 : vector<1x32xf32> to vector<16x32xf32>
      %c0_16 = arith.constant 0 : index
      %c0_17 = arith.constant 0 : index
      %20 = vector.load %arg7[%c0_16, %c0_17] : memref<16x32xf32, #tpu.memory_space<vmem>>, vector<16x32xf32>
      tpu.vector_store %arg7[%c0_16, %c0_17], %19 {strides = array<i32>} : memref<16x32xf32, #tpu.memory_space<vmem>>, vector<16x32xf32>,
    } else {
    }
    %c0 = arith.constant 0 : index
    %c0_1 = arith.constant 0 : index
    %3 = vector.load %arg2[%c0, %c0_1] : memref<16x32xbf16, #tpu.memory_space<vmem>>, vector<16x32xbf16>
    %c0_2 = arith.constant 0 : index
    %c0_3 = arith.constant 0 : index
    %4 = vector.load %arg3[%c0_2, %c0_3] : memref<32x128xbf16, #tpu.memory_space<vmem>>, vector<32x128xbf16>
    %cst = arith.constant dense<0.000000e+00> : vector<16x128xf32>
    %5 = tpu.matmul %3, %4, %cst {dimension_numbers = #tpu.dot_dimension_numbers<[1], [0], [0], [1], [0, 0, 1, 1], [], []>} : vector<16x32xbf16>, vector<32x128xbf16>, vector<16x128xf32> -> vector<16x128xf32>
    %c0_4 = arith.constant 0 : index
    %c0_5 = arith.constant 0 : index
    %6 = vector.load %arg4[%c0_4, %c0_5] : memref<1x128xf32, #tpu.memory_space<vmem>>, vector<1x128xf32>
    %7 = vector.broadcast %6 : vector<1x128xf32> to vector<16x128xf32>
    %8 = arith.addf %5, %7 : vector<16x128xf32>
    %cst_6 = arith.constant 0.000000e+00 : f32
    %9 = vector.broadcast %cst_6 : f32 to vector<16x128xf32>
    %10 = arith.maximumf %8, %9 : vector<16x128xf32>
    %c0_7 = arith.constant 0 : index
    %c0_8 = arith.constant 0 : index
    %11 = vector.load %arg7[%c0_7, %c0_8] : memref<16x32xf32, #tpu.memory_space<vmem>>, vector<16x32xf32>
    %12 = arith.truncf %10 : vector<16x128xf32> to vector<16x128xbf16>
    %c0_9 = arith.constant 0 : index
    %c0_10 = arith.constant 0 : index
    %13 = vector.load %arg5[%c0_9, %c0_10] : memref<128x32xbf16, #tpu.memory_space<vmem>>, vector<128x32xbf16>
    %cst_11 = arith.constant dense<0.000000e+00> : vector<16x32xf32>
    %14 = tpu.matmul %12, %13, %cst_11 {dimension_numbers = #tpu.dot_dimension_numbers<[1], [0], [0], [1], [0, 0, 1, 1], [], []>} : vector<16x128xbf16>, vector<128x32xbf16>, vector<16x32xf32> -> vector<16x32xf32>
    %15 = arith.addf %11, %14 : vector<16x32xf32>
    %c0_12 = arith.constant 0 : index
    %c0_13 = arith.constant 0 : index
    %16 = vector.load %arg7[%c0_12, %c0_13] : memref<16x32xf32, #tpu.memory_space<vmem>>, vector<16x32xf32>
    tpu.vector_store %arg7[%c0_12, %c0_13], %15 {strides = array<i32>} : memref<16x32xf32, #tpu.memory_space<vmem>>, vector<16x32xf32>,
    return
  }
  func.func @transform_0(%arg0: i32, %arg1: i32) -> (i32, i32) {
    %c0_i32 = arith.constant 0 : i32
    %c0_i32_0 = arith.constant 0 : i32
    return %arg0, %c0_i32 : i32, i32
  }
  func.func @transform_1(%arg0: i32, %arg1: i32) -> (i32, i32) {
    %c0_i32 = arith.constant 0 : i32
    %c0_i32_0 = arith.constant 0 : i32
    return %c0_i32, %arg1 : i32, i32
  }
  func.func @transform_2(%arg0: i32, %arg1: i32) -> (i32, i32) {
    %c0_i32 = arith.constant 0 : i32
    %c0_i32_0 = arith.constant 0 : i32
    return %c0_i32, %arg1 : i32, i32
  }
  func.func @transform_3(%arg0: i32, %arg1: i32) -> (i32, i32) {
    %c0_i32 = arith.constant 0 : i32
    %c0_i32_0 = arith.constant 0 : i32
    return %arg1, %c0_i32 : i32, i32
  }
  func.func @transform_4(%arg0: i32, %arg1: i32) -> (i32, i32) {
    %c0_i32 = arith.constant 0 : i32
    %c0_i32_0 = arith.constant 0 : i32
    %c0_i32_1 = arith.constant 0 : i32
    return %c0_i32, %c0_i32_0 : i32, i32
  }
  func.func @transform_5(%arg0: i32, %arg1: i32) -> (i32, i32) {
    %c0_i32 = arith.constant 0 : i32
    %c0_i32_0 = arith.constant 0 : i32
    return %arg0, %c0_i32 : i32, i32
  }
}

</mosaic_0001>

<llo_original>
// kernel: tpu_custom_call.1
$region0: #{tpu_custom_call.1}
  #allocation0 [shape = 'u32[]', space=smem, size = 0x4, offset = 0x4, fixed_abs, tag = 'smem constant byte address 0x4 - core index']
  #allocation1 [shape = 'u32[144,128]{1,0:T(1,128)}', space=vmem, size = 0x12000, scoped, tag = 'internal scratch']
  %s0 = inlined_call_operand.vmem [shape: bf16[16,32], index: 0, kind: input, shape index: {}]
  %s1 = inlined_call_operand.vmem [shape: bf16[32,256], index: 1, kind: input, shape index: {}]
  %s2 = inlined_call_operand.vmem [shape: f32[1,256], index: 2, kind: input, shape index: {}]
  %s3 = inlined_call_operand.vmem [shape: bf16[256,32], index: 3, kind: input, shape index: {}]
  %s4 = inlined_call_operand.vmem [shape: f32[1,32], index: 4, kind: input, shape index: {}]
  %s5 = inlined_call_operand.hbm [shape: f32[16,32], index: 5, kind: output, shape index: {}]
  %s6 = sld [smem:[#allocation0]]
  $region98: #{tpu_custom_call.1} parent=0
    _
  %s8 = ssub.s32 1, %s6
  %s9 = scalar_select 0, %s8, %s6
  $region1: #{tpu_custom_call.1} parent=0
    #allocation2 [shape = 'u8[16384]{0}', space=vmem, size = 0x4000, scoped, tag = 'input window, operand 1']
    #allocation3 [shape = 'u8[8192]{0}', space=vmem, size = 0x2000, scoped, tag = 'output window, operand 0, single buffered']
    #allocation4 [shape = 's32[2]{0}', space=sflag, size = 0x8, scoped, tag = 'scoped memory for tpu_custom_call.1']
    %10 = vsyncpa [#allocation4], 0
    loop: start=0, step=1, limit=4
    $region2: #{tpu_custom_call.1} parent=1 // loop_pre_header
      _
    $region3: #{tpu_custom_call.1} parent=1 // loop_header
      %s12 = sphi 0, %s16
      %p13 = scmp.ge.s32.totalorder %s12, 4
      %s19 = sphi 0, %s31
      %s20 = sphi 0, %s27
      %s21 = sphi 0, %s19
      %s22 = sphi 0, %s20
      %s23 = sphi 0, %s21
      %s24 = sphi 0, %s22
      %s34 = sphi 0, %s36
      %s37 = sphi 0, %s34
      %s38 = sphi 0, %s37
      %s54 = sphi 0, %s38
      %s60 = sphi 0, %s62
      %s63 = sphi 0, %s60
      %s64 = sphi 0, %s63
      %s80 = sphi 0, %s64
      %s86 = sphi 0, %s88
      %s89 = sphi 0, %s86
      %s90 = sphi 0, %s89
      %s106 = sphi 0, %s90
      %s112 = sphi 0, %s114
      %s115 = sphi 0, %s112
      %s116 = sphi 0, %s115
      %s132 = sphi 0, %s116
      %s136 = sphi 0, %s136
      %s138 = sphi 0, %s136
      %s139 = sphi 0, %s138
      %s153 = sphi 0, %s139
      %s159 = sphi 0, %s161
      %s162 = sphi 0, %s159
      %s163 = sphi 0, %s162
      %s179 = sphi 0, %s163
    $region4: #{tpu_custom_call.1} parent=1 // loop_header_branch
      %15 = sbr.rel (%p13) target = $region8
    $region5: #{tpu_custom_call.1} parent=1 // loop_body
      %s17 = ssub.s32 %s12, 1
      %s18 = ssub.s32 %s12, 2
      %s25 = sadd.s32 1, %s20
      %p26 = scmp.ge.s32.totalorder %s25, 2
      %s27 = scalar_select %p26, 0, %s25
      %s28 = sadd.s32 1, %s19
      %s29 = scalar_select %p26, %s28, %s19
      %p30 = scmp.ge.s32.totalorder %s29, 1
      %s31 = scalar_select %p30, 0, %s29
      %s32 = ssub.s32 %s19, %s31
      %p33 = scmp.eq.s32.totalorder %s32, 0
      %s35 = sadd.s32 %s34, 1
      %s36 = scalar_select %p33, %s34, %s35
      %p39 = pneg %p33
      %p40 = scmp.eq.s32.totalorder %s12, 1
      %p41 = por %p39, %p40
      %p42 = scmp.ne.s32.totalorder %s34, %s37
      %p43 = scmp.eq.s32.totalorder %s12, 0
      %p44 = por %p42, %p43
      %p45 = scmp.ne.s32.totalorder %s34, %s37
      %p46 = scmp.eq.s32.totalorder %s17, 1
      %p47 = por %p45, %p46
      %p48 = scmp.ne.s32.totalorder %s37, %s38
      %p49 = scmp.eq.s32.totalorder %s17, 0
      %p50 = por %p48, %p49
      %p51 = scmp.ne.s32.totalorder %s37, %s38
      %p52 = scmp.eq.s32.totalorder %s18, 1
      %p53 = por %p51, %p52
      %p55 = scmp.ne.s32.totalorder %s38, %s54
      %p56 = scmp.eq.s32.totalorder %s18, 0
      %p57 = por %p55, %p56
      %s58 = ssub.s32 %s20, %s27
      %p59 = scmp.eq.s32.totalorder %s58, 0
      %s61 = sadd.s32 %s60, 1
      %s62 = scalar_select %p59, %s60, %s61
      %p65 = pneg %p59
      %p66 = scmp.eq.s32.totalorder %s12, 1
      %p67 = por %p65, %p66
      %p68 = scmp.ne.s32.totalorder %s60, %s63
      %p69 = scmp.eq.s32.totalorder %s12, 0
      %p70 = por %p68, %p69
      %p71 = scmp.ne.s32.totalorder %s60, %s63
      %p72 = scmp.eq.s32.totalorder %s17, 1
      %p73 = por %p71, %p72
      %p74 = scmp.ne.s32.totalorder %s63, %s64
      %p75 = scmp.eq.s32.totalorder %s17, 0
      %p76 = por %p74, %p75
      %p77 = scmp.ne.s32.totalorder %s63, %s64
      %p78 = scmp.eq.s32.totalorder %s18, 1
      %p79 = por %p77, %p78
      %p81 = scmp.ne.s32.totalorder %s64, %s80
      %p82 = scmp.eq.s32.totalorder %s18, 0
      %p83 = por %p81, %p82
      %s84 = ssub.s32 %s20, %s27
      %p85 = scmp.eq.s32.totalorder %s84, 0
      %s87 = sadd.s32 %s86, 1
      %s88 = scalar_select %p85, %s86, %s87
      %p91 = pneg %p85
      %p92 = scmp.eq.s32.totalorder %s12, 1
      %p93 = por %p91, %p92
      %p94 = scmp.ne.s32.totalorder %s86, %s89
      %p95 = scmp.eq.s32.totalorder %s12, 0
      %p96 = por %p94, %p95
      %p97 = scmp.ne.s32.totalorder %s86, %s89
      %p98 = scmp.eq.s32.totalorder %s17, 1
      %p99 = por %p97, %p98
      %p100 = scmp.ne.s32.totalorder %s89, %s90
      %p101 = scmp.eq.s32.totalorder %s17, 0
      %p102 = por %p100, %p101
      %p103 = scmp.ne.s32.totalorder %s89, %s90
      %p104 = scmp.eq.s32.totalorder %s18, 1
      %p105 = por %p103, %p104
      %p107 = scmp.ne.s32.totalorder %s90, %s106
      %p108 = scmp.eq.s32.totalorder %s18, 0
      %p109 = por %p107, %p108
      %s110 = ssub.s32 %s20, %s27
      %p111 = scmp.eq.s32.totalorder %s110, 0
      %s113 = sadd.s32 %s112, 1
      %s114 = scalar_select %p111, %s112, %s113
      %p117 = pneg %p111
      %p118 = scmp.eq.s32.totalorder %s12, 1
      %p119 = por %p117, %p118
      %p120 = scmp.ne.s32.totalorder %s112, %s115
      %p121 = scmp.eq.s32.totalorder %s12, 0
      %p122 = por %p120, %p121
      %p123 = scmp.ne.s32.totalorder %s112, %s115
      %p124 = scmp.eq.s32.totalorder %s17, 1
      %p125 = por %p123, %p124
      %p126 = scmp.ne.s32.totalorder %s115, %s116
      %p127 = scmp.eq.s32.totalorder %s17, 0
      %p128 = por %p126, %p127
      %p129 = scmp.ne.s32.totalorder %s115, %s116
      %p130 = scmp.eq.s32.totalorder %s18, 1
      %p131 = por %p129, %p130
      %p133 = scmp.ne.s32.totalorder %s116, %s132
      %p134 = scmp.eq.s32.totalorder %s18, 0
      %p135 = por %p133, %p134
      %s137 = sadd.s32 %s136, 1
      %p140 = scmp.eq.s32.totalorder %s12, 1
      %p141 = scmp.ne.s32.totalorder %s136, %s138
      %p142 = scmp.eq.s32.totalorder %s12, 0
      %p143 = por %p141, %p142
      %p144 = scmp.ne.s32.totalorder %s136, %s138
      %p145 = scmp.eq.s32.totalorder %s17, 1
      %p146 = por %p144, %p145
      %p147 = scmp.ne.s32.totalorder %s138, %s139
      %p148 = scmp.eq.s32.totalorder %s17, 0
      %p149 = por %p147, %p148
      %p150 = scmp.ne.s32.totalorder %s138, %s139
      %p151 = scmp.eq.s32.totalorder %s18, 1
      %p152 = por %p150, %p151
      %p154 = scmp.ne.s32.totalorder %s139, %s153
      %p155 = scmp.eq.s32.totalorder %s18, 0
      %p156 = por %p154, %p155
      %s157 = ssub.s32 %s19, %s31
      %p158 = scmp.eq.s32.totalorder %s157, 0
      %s160 = sadd.s32 %s159, 1
      %s161 = scalar_select %p158, %s159, %s160
      %p164 = pneg %p158
      %p165 = scmp.eq.s32.totalorder %s12, 1
      %p166 = por %p164, %p165
      %p167 = scmp.ne.s32.totalorder %s159, %s162
      %p168 = scmp.eq.s32.totalorder %s12, 0
      %p169 = por %p167, %p168
      %p170 = scmp.ne.s32.totalorder %s159, %s162
      %p171 = scmp.eq.s32.totalorder %s17, 1
      %p172 = por %p170, %p171
      %p173 = scmp.ne.s32.totalorder %s162, %s163
      %p174 = scmp.eq.s32.totalorder %s17, 0
      %p175 = por %p173, %p174
      %p176 = scmp.ne.s32.totalorder %s162, %s163
      %p177 = scmp.eq.s32.totalorder %s18, 1
      %p178 = por %p176, %p177
      %p180 = scmp.ne.s32.totalorder %s163, %s179
      %p181 = scmp.eq.s32.totalorder %s18, 0
      %p182 = por %p180, %p181
      %p183 = scmp.le.s32.totalorder 1, %s12
      %p184 = scmp.lt.s32.totalorder %s12, 3
      %p185 = pnand %p183, %p184
      %p186 = pneg %p185
      // Predicated region
      $region9: #{tpu_custom_call.1} parent=5 // pred_check
        _
      $region10: #{tpu_custom_call.1} parent=5 // pred_check_branch
        %188 = sbr.rel (%p185) target = $region12
      $region11: #{tpu_custom_call.1} parent=5 // pred_region
        %s189 = ssub.s32 %s12, 1
        // Predicated region
        $region13: #{tpu_custom_call.1} parent=11 // pred_check
          %p190 = pneg %p50
        $region14: #{tpu_custom_call.1} parent=11 // pred_check_branch
          %192 = sbr.rel (%p190) target = $region16
        $region15: #{tpu_custom_call.1} parent=11 // pred_region
          %s193 = smul.u32 2, %s21
          %p194 = scmp.lt.s32.totalorder %s193, 1
          %s195 = scalar_select %p194, %s193, 1
          %s196 = smul.addr %s195, 4
          %s197 = scalar_lea.vmem %s0, %s196
          %s198 = smul.u32 2, %s21
        $region16: #{tpu_custom_call.1} parent=11 // pred_fallthru
          _
        // Predicated region
        $region17: #{tpu_custom_call.1} parent=11 // pred_check
          %p199 = pneg %p149
        $region18: #{tpu_custom_call.1} parent=11 // pred_check_branch
          %201 = sbr.rel (%p199) target = $region20
        $region19: #{tpu_custom_call.1} parent=11 // pred_region
          _
        $region20: #{tpu_custom_call.1} parent=11 // pred_fallthru
          _
      $region12: #{tpu_custom_call.1} parent=5 // pred_fallthru
        _
      %p202 = scmp.lt.s32.totalorder %s12, 2
      // Predicated region
      $region21: #{tpu_custom_call.1} parent=5 // pred_check
        %p203 = pneg %p202
      $region22: #{tpu_custom_call.1} parent=5 // pred_check_branch
        %205 = sbr.rel (%p203) target = $region24
      $region23: #{tpu_custom_call.1} parent=5 // pred_region
        // Predicated region
        $region25: #{tpu_custom_call.1} parent=23 // pred_check
          %p206 = pneg %p70
        $region26: #{tpu_custom_call.1} parent=23 // pred_check_branch
          %208 = sbr.rel (%p206) target = $region28
        $region27: #{tpu_custom_call.1} parent=23 // pred_region
          %s209 = sand.u32 %s60, 1
          %s210 = sand.u32 %s60, 1
          %s211 = smul.addr %s210, 16
          %s212 = scalar_lea.vmem [#allocation2], %s211
          %s213 = smul.addr %s20, 4
          %s214 = scalar_lea.vmem %s1, %s213
          // Predicated region
          $region29: #{tpu_custom_call.1} parent=27 // pred_check
            _
          $region30: #{tpu_custom_call.1} parent=27 // pred_check_branch
            %216 = sbr.rel (0) target = $region32
          $region31: #{tpu_custom_call.1} parent=27 // pred_region
            // Predicated region
            $region33: #{tpu_custom_call.1} parent=31 // pred_check
              _
            $region34: #{tpu_custom_call.1} parent=31 // pred_check_branch
              %218 = sbr.rel target = $region36
            $region35: #{tpu_custom_call.1} parent=31 // pred_region
              // Predicated region
              $region48: #{tpu_custom_call.1} parent=35 // pred_check
                _
              $region49: #{tpu_custom_call.1} parent=35 // pred_check_branch
                %239 = sbr.rel (0) target = $region51
              $region50: #{tpu_custom_call.1} parent=35 // pred_region
                loop: start=0, step=1, limit=1
                $region52: #{tpu_custom_call.1} parent=50 // loop_pre_header
                  _
                $region53: #{tpu_custom_call.1} parent=50 // loop_header
                  %s241 = sphi 0, %s245
                  %p242 = scmp.ge.s32.totalorder %s241, 1
                  %s246 = sphi %s214, %s214
                  %s247 = sphi %s212, %s212
                $region54: #{tpu_custom_call.1} parent=50 // loop_header_branch
                  %244 = sbr.rel (%p242) target = $region58
                $region55: #{tpu_custom_call.1} parent=50 // loop_body
                  _
                $region56: #{tpu_custom_call.1} parent=50 // loop_footer
                  %s245 = sadd.s32 1, %s241
                $region57: #{tpu_custom_call.1} parent=50 // loop_footer_branch
                  %240 = sbr.rel target = $region53
                $region58: #{tpu_custom_call.1} parent=50 // loop_exit
                  _
                loop: start=0, step=1, limit=1
                $region59: #{tpu_custom_call.1} parent=50 // loop_pre_header
                  _
                $region60: #{tpu_custom_call.1} parent=50 // loop_header
                  %s250 = sphi 0, %s254
                  %p251 = scmp.ge.s32.totalorder %s250, 1
                  %s255 = sphi %s214, %s214
                  %s256 = sphi %s212, %s212
                $region61: #{tpu_custom_call.1} parent=50 // loop_header_branch
                  %253 = sbr.rel (%p251) target = $region65
                $region62: #{tpu_custom_call.1} parent=50 // loop_body
                  %v257 = vld [vmem:[%s255] sm:$0xf]
                  %258 = vst [vmem:[%s256] sm:$0xf] %v257
                  %v259 = vld [vmem:[%s255 + $0x8] sm:$0xf]
                  %260 = vst [vmem:[%s256 + $0x4] sm:$0xf] %v259
                  %v261 = vld [vmem:[%s255 + $0x10] sm:$0xf]
                  %262 = vst [vmem:[%s256 + $0x8] sm:$0xf] %v261
                  %v263 = vld [vmem:[%s255 + $0x18] sm:$0xf]
                  %264 = vst [vmem:[%s256 + $0xc] sm:$0xf] %v263
                $region63: #{tpu_custom_call.1} parent=50 // loop_footer
                  %s254 = sadd.s32 1, %s250
                $region64: #{tpu_custom_call.1} parent=50 // loop_footer_branch
                  %249 = sbr.rel target = $region60
                $region65: #{tpu_custom_call.1} parent=50 // loop_exit
                  _
              $region51: #{tpu_custom_call.1} parent=35 // pred_fallthru
                _
            $region36: #{tpu_custom_call.1} parent=31 // pred_fallthru
              _
            // Predicated region
            $region37: #{tpu_custom_call.1} parent=31 // pred_check
              _
            $region38: #{tpu_custom_call.1} parent=31 // pred_check_branch
              %220 = sbr.rel (0) target = $region40
            $region39: #{tpu_custom_call.1} parent=31 // pred_region
              loop: start=0, step=1, limit=1
              $region41: #{tpu_custom_call.1} parent=39 // loop_pre_header
                _
              $region42: #{tpu_custom_call.1} parent=39 // loop_header
                %s223 = sphi 0, %s227
                %p224 = scmp.ge.s32.totalorder %s223, 1
                %s228 = sphi %s214, %s214
                %s229 = sphi %s212, %s212
              $region43: #{tpu_custom_call.1} parent=39 // loop_header_branch
                %226 = sbr.rel (%p224) target = $region47
              $region44: #{tpu_custom_call.1} parent=39 // loop_body
                %v230 = vld [vmem:[%s228] sm:$0xf]
                %231 = vst [vmem:[%s229] sm:$0xf] %v230
                %v232 = vld [vmem:[%s228 + $0x8] sm:$0xf]
                %233 = vst [vmem:[%s229 + $0x4] sm:$0xf] %v232
                %v234 = vld [vmem:[%s228 + $0x10] sm:$0xf]
                %235 = vst [vmem:[%s229 + $0x8] sm:$0xf] %v234
                %v236 = vld [vmem:[%s228 + $0x18] sm:$0xf]
                %237 = vst [vmem:[%s229 + $0xc] sm:$0xf] %v236
              $region45: #{tpu_custom_call.1} parent=39 // loop_footer
                %s227 = sadd.s32 1, %s223
              $region46: #{tpu_custom_call.1} parent=39 // loop_footer_branch
                %222 = sbr.rel target = $region42
              $region47: #{tpu_custom_call.1} parent=39 // loop_exit
                _
            $region40: #{tpu_custom_call.1} parent=31 // pred_fallthru
              _
          $region32: #{tpu_custom_call.1} parent=27 // pred_fallthru
            _
          %265 = vnop
        $region28: #{tpu_custom_call.1} parent=23 // pred_fallthru
          _
        // Predicated region
        $region66: #{tpu_custom_call.1} parent=23 // pred_check
          %p266 = pneg %p96
        $region67: #{tpu_custom_call.1} parent=23 // pred_check_branch
          %268 = sbr.rel (%p266) target = $region69
        $region68: #{tpu_custom_call.1} parent=23 // pred_region
          %p269 = scmp.lt.s32.totalorder %s20, 1
          %s270 = scalar_select %p269, %s20, 1
          %s271 = scalar_lea.vmem %s2, %s270
        $region69: #{tpu_custom_call.1} parent=23 // pred_fallthru
          _
        // Predicated region
        $region70: #{tpu_custom_call.1} parent=23 // pred_check
          %p272 = pneg %p122
        $region71: #{tpu_custom_call.1} parent=23 // pred_check_branch
          %274 = sbr.rel (%p272) target = $region73
        $region72: #{tpu_custom_call.1} parent=23 // pred_region
          %s275 = smul.u32 16, %s20
          %p276 = scmp.lt.s32.totalorder %s275, 31
          %s277 = scalar_select %p276, %s275, 31
          %s278 = smul.addr %s277, 4
          %s279 = scalar_lea.vmem %s3, %s278
          %s280 = smul.u32 16, %s20
        $region73: #{tpu_custom_call.1} parent=23 // pred_fallthru
          _
      $region24: #{tpu_custom_call.1} parent=5 // pred_fallthru
        _
      %p281 = scmp.le.s32.totalorder 1, %s12
      %p282 = scmp.lt.s32.totalorder %s12, 3
      %p283 = pnand %p281, %p282
      %p284 = pneg %p283
      // Predicated region
      $region74: #{tpu_custom_call.1} parent=5 // pred_check
        _
      $region75: #{tpu_custom_call.1} parent=5 // pred_check_branch
        %286 = sbr.rel (%p283) target = $region77
      $region76: #{tpu_custom_call.1} parent=5 // pred_region
        %s287 = ssub.s32 %s12, 1
        %s288 = sand.u32 %s63, 1
        %s289 = sand.u32 %s63, 1
        %s290 = smul.addr %s289, 16
        %s291 = scalar_lea.vmem [#allocation2], %s290
        // Predicated region
        $region78: #{tpu_custom_call.1} parent=76 // pred_check
          %p292 = pneg %p76
        $region79: #{tpu_custom_call.1} parent=76 // pred_check_branch
          %294 = sbr.rel (%p292) target = $region81
        $region80: #{tpu_custom_call.1} parent=76 // pred_region
          _
        $region81: #{tpu_custom_call.1} parent=76 // pred_fallthru
          _
        %s295 = smul.u32 2, %s21
        %p296 = scmp.lt.s32.totalorder %s295, 1
        %s297 = scalar_select %p296, %s295, 1
        %s298 = smul.addr %s297, 4
        %s299 = scalar_lea.vmem %s0, %s298
        %p300 = pneg %p50
        %p301 = pneg %p47
        %s302 = sand.u32 %s63, 1
        %s303 = sand.u32 %s63, 1
        %s304 = smul.addr %s303, 16
        %s305 = scalar_lea.vmem [#allocation2], %s304
        %p306 = pneg %p76
        %p307 = pneg %p73
        %p308 = scmp.lt.s32.totalorder %s22, 1
        %s309 = scalar_select %p308, %s22, 1
        %s310 = scalar_lea.vmem %s2, %s309
        %p311 = pneg %p102
        %p312 = pneg %p99
        %s313 = smul.u32 16, %s22
        %p314 = scmp.lt.s32.totalorder %s313, 31
        %s315 = scalar_select %p314, %s313, 31
        %s316 = smul.addr %s315, 4
        %s317 = scalar_lea.vmem %s3, %s316
        %p318 = pneg %p128
        %p319 = pneg %p125
        %p320 = pneg %p149
        %p321 = pneg %p146
        %p322 = pneg %p175
        %p323 = pneg %p172
        %s324 = smul.u32 2, %s21
        %p325 = scmp.lt.s32.totalorder %s324, 1
        %s326 = scalar_select %p325, %s324, 1
        %s327 = smul.addr %s326, 4
        %s328 = scalar_lea.vmem %s0, %s327
        %s329 = smul.u32 2, %s21
        %p330 = scmp.lt.s32.totalorder %s22, 1
        %s331 = scalar_select %p330, %s22, 1
        %s332 = scalar_lea.vmem %s2, %s331
        %s333 = smul.u32 16, %s22
        %p334 = scmp.lt.s32.totalorder %s333, 31
        %s335 = scalar_select %p334, %s333, 31
        %s336 = smul.addr %s335, 4
        %s337 = scalar_lea.vmem %s3, %s336
        %s338 = smul.u32 16, %s22
        %s339 = smul.u32 2, %s21
        %p341 = scmp.eq.s32.totalorder %s22, 0
        // Predicated region
        $region82: #{tpu_custom_call.1} parent=76 // pred_check
          %p342 = pneg %p341
        $region83: #{tpu_custom_call.1} parent=76 // pred_check_branch
          %344 = sbr.rel (%p342) target = $region85
        $region84: #{tpu_custom_call.1} parent=76 // pred_region
          %v345 = vld [vmem:[%s4] sm:$0x1]
          %v347 = vlaneseq
          %v348 = vshrl.u32 %v347, 7
          %v349 = vsub.s32 0, %v348
          %v350 = vrot.slane %v345, %v349
          %vm352 = vcmask 261120
          %353 = vst.msk [vmem:[#allocation3] sm:$0xff] %vm352, %v350
          %354 = vst.msk [vmem:[#allocation3 + $0x8] sm:$0xff] %vm352, %v350
        $region85: #{tpu_custom_call.1} parent=76 // pred_fallthru
          _
        %v355 = vld [vmem:[%s328] sm:$0xf]
        %v356 = vld [vmem:[%s328 + $0x4] sm:$0xf]
        %v357 = vld [vmem:[%s291] sm:$0xf]
        %v358 = vld [vmem:[%s291 + $0x4] sm:$0xf]
        %v359 = vld [vmem:[%s291 + $0x8] sm:$0xf]
        %v360 = vld [vmem:[%s291 + $0xc] sm:$0xf]
        %v361 = vld [vmem:[%s332] sm:$0x1]
        %v363 = vlaneseq
        %v364 = vshrl.u32 %v363, 7
        %v365 = vsub.s32 0, %v364
        %v366 = vrot.slane %v361, %v365
        %v370 = vunpack.c.l.b16 %v355
        %v371 = vunpack.c.l.b16 %v356
        %v372 = vpack.c.b16 %v371, %v370
        %v377 = vunpack.c.l.b16 %v357
        %v378 = vunpack.c.l.b16 %v358
        %v379 = vunpack.c.l.b16 %v359
        %v380 = vunpack.c.l.b16 %v360
        %v381 = vpack.c.b16 %v378, %v377
        %v382 = vpack.c.b16 %v380, %v379
        %vm385 = vcmask 261120
        %v387 = vsel %vm385, %v372, 0
        %389 = vmatprep.subr.bf16.mxu0 0
        %390 = vmatpush1.bf16.msra.mxu0 %v381
        %391 = vmatprep.subr.bf16.mxu0 0
        %392 = vmatpush1.bf16.msra.mxu0 %v382
        %393 = vmatprep.subr.bf16.mxu0 0
        %394 = vmatpush1.bf16.msra.mxu0 0
        %395 = vmatprep.subr.bf16.mxu0 0
        %396 = vmatpush1.bf16.msra.mxu0 0
        %397 = vmatprep.subr.bf16.mxu0 0
        %398 = vmatpush1.bf16.msra.mxu0 0
        %399 = vmatprep.subr.bf16.mxu0 0
        %400 = vmatpush1.bf16.msra.mxu0 0
        %401 = vmatprep.subr.bf16.mxu0 0
        %402 = vmatpush1.bf16.msra.mxu0 0
        %403 = vmatprep.subr.bf16.mxu0 0
        %404 = vmatpush1.bf16.msra.mxu0 0
        %405 = vmatprep.subr.bf16.mxu0 0
        %406 = vmatpush1.bf16.msra.mxu0 0
        %407 = vmatprep.subr.bf16.mxu0 0
        %408 = vmatpush1.bf16.msra.mxu0 0
        %409 = vmatprep.subr.bf16.mxu0 0
        %410 = vmatpush1.bf16.msra.mxu0 0
        %411 = vmatprep.subr.bf16.mxu0 0
        %412 = vmatpush1.bf16.msra.mxu0 0
        %413 = vmatprep.subr.bf16.mxu0 0
        %414 = vmatpush1.bf16.msra.mxu0 0
        %415 = vmatprep.subr.bf16.mxu0 0
        %416 = vmatpush1.bf16.msra.mxu0 0
        %417 = vmatprep.subr.bf16.mxu0 0
        %418 = vmatpush1.bf16.msra.mxu0 0
        %419 = vmatprep.subr.bf16.mxu0 0
        %420 = vmatpush1.bf16.msra.mxu0 0
        %421 = vmatprep.mubr.bf16.mxu0 0
        %422 = vmatmul.mubr.bf16.gmra.mrb[0].mxu0 %v387
        %v423 = vpop.f32.mrb[0].mxu0
        %v424 = vadd.f32 %v366, %v423
        %v425 = vpop.f32.mrb[0].mxu0
        %v426 = vpop.f32.mrb[0].mxu0
        %v427 = vadd.f32 %v366, %v426
        %v428 = vpop.f32.mrb[0].mxu0
        %429 = vdwg.mxu0
        %v430 = vmax.f32 %v424, 0.0
        %v431 = vmax.f32 %v427, 0.0
        %v432 = vld [vmem:[#allocation3] sm:$0xff]
        %v433 = vld [vmem:[#allocation3 + $0x8] sm:$0xff]
        %v434 = vpack.c.bf16 %v431, %v430
        %v435 = vld [vmem:[%s337] sm:$0xf]
        %v436 = vld [vmem:[%s337 + $0x4] sm:$0xf]
        %v437 = vld [vmem:[%s337 + $0x8] sm:$0xf]
        %v438 = vld [vmem:[%s337 + $0xc] sm:$0xf]
        %v439 = vld [vmem:[%s337 + $0x10] sm:$0xf]
        %v440 = vld [vmem:[%s337 + $0x14] sm:$0xf]
        %v441 = vld [vmem:[%s337 + $0x18] sm:$0xf]
        %v442 = vld [vmem:[%s337 + $0x1c] sm:$0xf]
        %v443 = vld [vmem:[%s337 + $0x20] sm:$0xf]
        %v444 = vld [vmem:[%s337 + $0x24] sm:$0xf]
        %v445 = vld [vmem:[%s337 + $0x28] sm:$0xf]
        %v446 = vld [vmem:[%s337 + $0x2c] sm:$0xf]
        %v447 = vld [vmem:[%s337 + $0x30] sm:$0xf]
        %v448 = vld [vmem:[%s337 + $0x34] sm:$0xf]
        %v449 = vld [vmem:[%s337 + $0x38] sm:$0xf]
        %v450 = vld [vmem:[%s337 + $0x3c] sm:$0xf]
        %v467 = vunpack.c.l.b16 %v435
        %v468 = vunpack.c.l.b16 %v436
        %v469 = vunpack.c.l.b16 %v437
        %v470 = vunpack.c.l.b16 %v438
        %v471 = vunpack.c.l.b16 %v439
        %v472 = vunpack.c.l.b16 %v440
        %v473 = vunpack.c.l.b16 %v441
        %v474 = vunpack.c.l.b16 %v442
        %v475 = vunpack.c.l.b16 %v443
        %v476 = vunpack.c.l.b16 %v444
        %v477 = vunpack.c.l.b16 %v445
        %v478 = vunpack.c.l.b16 %v446
        %v479 = vunpack.c.l.b16 %v447
        %v480 = vunpack.c.l.b16 %v448
        %v481 = vunpack.c.l.b16 %v449
        %v482 = vunpack.c.l.b16 %v450
        %v483 = vpack.c.b16 %v468, %v467
        %v484 = vpack.c.b16 %v470, %v469
        %v485 = vpack.c.b16 %v472, %v471
        %v486 = vpack.c.b16 %v474, %v473
        %v487 = vpack.c.b16 %v476, %v475
        %v488 = vpack.c.b16 %v478, %v477
        %v489 = vpack.c.b16 %v480, %v479
        %v490 = vpack.c.b16 %v482, %v481
        %499 = vmatprep.subr.bf16.mxu0 0
        %500 = vmatpush1.bf16.msra.mxu0 %v483
        %501 = vmatprep.subr.bf16.mxu0 0
        %502 = vmatpush1.bf16.msra.mxu0 %v484
        %503 = vmatprep.subr.bf16.mxu0 0
        %504 = vmatpush1.bf16.msra.mxu0 %v485
        %505 = vmatprep.subr.bf16.mxu0 0
        %506 = vmatpush1.bf16.msra.mxu0 %v486
        %507 = vmatprep.subr.bf16.mxu0 0
        %508 = vmatpush1.bf16.msra.mxu0 %v487
        %509 = vmatprep.subr.bf16.mxu0 0
        %510 = vmatpush1.bf16.msra.mxu0 %v488
        %511 = vmatprep.subr.bf16.mxu0 0
        %512 = vmatpush1.bf16.msra.mxu0 %v489
        %513 = vmatprep.subr.bf16.mxu0 0
        %514 = vmatpush1.bf16.msra.mxu0 %v490
        %515 = vmatprep.subr.bf16.mxu0 0
        %516 = vmatpush1.bf16.msra.mxu0 0
        %517 = vmatprep.subr.bf16.mxu0 0
        %518 = vmatpush1.bf16.msra.mxu0 0
        %519 = vmatprep.subr.bf16.mxu0 0
        %520 = vmatpush1.bf16.msra.mxu0 0
        %521 = vmatprep.subr.bf16.mxu0 0
        %522 = vmatpush1.bf16.msra.mxu0 0
        %523 = vmatprep.subr.bf16.mxu0 0
        %524 = vmatpush1.bf16.msra.mxu0 0
        %525 = vmatprep.subr.bf16.mxu0 0
        %526 = vmatpush1.bf16.msra.mxu0 0
        %527 = vmatprep.subr.bf16.mxu0 0
        %528 = vmatpush1.bf16.msra.mxu0 0
        %529 = vmatprep.subr.bf16.mxu0 0
        %530 = vmatpush1.bf16.msra.mxu0 0
        %531 = vmatprep.mubr.bf16.mxu0 0
        %532 = vmatmul.mubr.bf16.gmra.mrb[0].mxu0 %v434
        %v533 = vpop.f32.mrb[0].mxu0
        %v534 = vadd.f32 0.0, %v533
        %v535 = vpop.f32.mrb[0].mxu0
        %v536 = vpop.f32.mrb[0].mxu0
        %v537 = vadd.f32 0.0, %v536
        %v538 = vpop.f32.mrb[0].mxu0
        %539 = vdwg.mxu0
        %v540 = vadd.f32 %v432, %v534
        %v541 = vadd.f32 %v433, %v537
        %542 = vst.msk [vmem:[#allocation3] sm:$0xff] %vm385, %v540
        %543 = vst.msk [vmem:[#allocation3 + $0x8] sm:$0xff] %vm385, %v541
        // Predicated region
        $region86: #{tpu_custom_call.1} parent=76 // pred_check
          %p544 = pneg %p172
        $region87: #{tpu_custom_call.1} parent=76 // pred_check_branch
          %546 = sbr.rel (%p544) target = $region89
        $region88: #{tpu_custom_call.1} parent=76 // pred_region
          %s547 = smul.u32 2, %s21
          %s549 = ssub.s32 256, 256
          %550 = vsyncadd [#allocation4], %s549
          %s551 = smul.addr %s547, 128
          %s552 = scalar_lea.hbm %s5, %s551
          %s553 = sshll.u32 [#allocation3], 4
          %s554 = int_to_ptr.vmem [resolvable:$true] %s553
          %559 = dma.vmem_to_hbm [thread:$0]  %s554, 256, %s552, [#allocation4], 128, 128, 8
        $region89: #{tpu_custom_call.1} parent=76 // pred_fallthru
          _
        // Predicated region
        $region90: #{tpu_custom_call.1} parent=76 // pred_check
          %p560 = pneg %p172
        $region91: #{tpu_custom_call.1} parent=76 // pred_check_branch
          %562 = sbr.rel (%p560) target = $region93
        $region92: #{tpu_custom_call.1} parent=76 // pred_region
          %563 = dma.done [#allocation4], 256
        $region93: #{tpu_custom_call.1} parent=76 // pred_fallthru
          _
      $region77: #{tpu_custom_call.1} parent=5 // pred_fallthru
        _
      %p564 = scmp.le.s32.totalorder 2, %s12
      // Predicated region
      $region94: #{tpu_custom_call.1} parent=5 // pred_check
        %p565 = pneg %p564
      $region95: #{tpu_custom_call.1} parent=5 // pred_check_branch
        %567 = sbr.rel (%p565) target = $region97
      $region96: #{tpu_custom_call.1} parent=5 // pred_region
        %s568 = ssub.s32 %s12, 2
      $region97: #{tpu_custom_call.1} parent=5 // pred_fallthru
        _
    $region6: #{tpu_custom_call.1} parent=1 // loop_footer
      %s16 = sadd.s32 1, %s12
    $region7: #{tpu_custom_call.1} parent=1 // loop_footer_branch
      %11 = sbr.rel target = $region3
    $region8: #{tpu_custom_call.1} parent=1 // loop_exit
      _
    %569 = vsyncpa [#allocation4], 1
    %s570 = scalar_lea.sflag [#allocation4], 1
    %571 = vsyncpa %s570, 1

</llo_original>
